<compile_context>
chip_gen: v6e
topology: v6e:2x2x1
jax: 0.10.0
libtpu: 0.0.40
codegen_flags: <defaults>
</compile_context>

<pallas_src>
import math

import jax
import jax.numpy as jnp
from jax.experimental import pallas as pl
from jax.experimental.pallas import tpu as pltpu


def _round_up(n, m):
    return ((n + m - 1) // m) * m


def policy_kernel(x_ref, w1_ref, b1_ref, w2_ref, b2_ref, wm_ref, bm_ref,
                  ws_ref, bs_ref, mean_ref, logstd_ref):
    cdt = w1_ref.dtype  # MXU-input dtype (f32 or bf16); accumulation stays f32.

    # Hidden layer 1: Linear(state_dim, 64) + ReLU.
    x = x_ref[...].astype(cdt)  # in-kernel cast: no extra HBM pass over x
    h1 = jnp.dot(x, w1_ref[...], preferred_element_type=jnp.float32)
    h1 = jnp.maximum(h1 + b1_ref[...], 0.0).astype(cdt)

    # Hidden layer 2: Linear(64, 64) + ReLU.
    h2 = jnp.dot(h1, w2_ref[...], preferred_element_type=jnp.float32)
    h2 = jnp.maximum(h2 + b2_ref[...], 0.0).astype(cdt)

    # Heads.
    mean_raw = jnp.dot(h2, wm_ref[...],
                       preferred_element_type=jnp.float32) + bm_ref[...]
    logstd_raw = jnp.dot(h2, ws_ref[...],
                         preferred_element_type=jnp.float32) + bs_ref[...]

    # mean: tanh on column 0, sigmoid on the rest; log_std: tanh everywhere.
    col = jax.lax.broadcasted_iota(jnp.int32, mean_raw.shape, 1)
    mean_ref[...] = jnp.where(col == 0, jnp.tanh(mean_raw),
                              jax.nn.sigmoid(mean_raw))
    logstd_ref[...] = jnp.tanh(logstd_raw)


def policy_forward(x, params, *, block_batch=4096, compute_dtype=jnp.float32,
                   vmem_limit_bytes=48 * 1024 * 1024):
    """x: (B, state_dim). Returns (mean, log_std), each (B, action_dim) f32."""
    w1, b1, w2, b2, wm, bm, ws, bs = params
    B, S = x.shape
    H = w1.shape[1]
    A = wm.shape[1]

    # Batch tile: multiple of 8 sublanes, capped at block_batch; for large B
    # also cap at ceil(B/2) so the parallel batch axis has >= 2 grid steps and
    # both TensorCores get work (v7x megacore).
    tb = _round_up(min(block_batch, B), 8)
    if B >= 1024:
        tb = min(tb, _round_up(pl.cdiv(B, 2), 8))
    grid = (pl.cdiv(B, tb),)  # ragged last block handled by Pallas masking

    # Weights in compute_dtype (tiny one-time cast); biases/accum/outputs f32.
    w1c, w2c, wmc, wsc = (w.astype(compute_dtype) for w in (w1, w2, wm, ws))
    b1f, b2f, bmf, bsf = (b.astype(jnp.float32) for b in (b1, b2, bm, bs))

    # Weights/biases: full-array blocks with a constant block index so they
    # stay resident in VMEM across all grid steps (no re-DMA).
    def resident(a):
        return pl.BlockSpec(a.shape, lambda i, _nd=a.ndim: (0,) * _nd)

    wbytes = jnp.dtype(compute_dtype).itemsize
    cost = pl.CostEstimate(
        flops=2 * B * (S * H + H * H + 2 * H * A),
        transcendentals=B * 2 * A,
        bytes_accessed=(B * S * 4                          # read x (f32)
                        + B * 2 * A * 4                    # write mean, log_std
                        + (S * H + H * H + 2 * H * A) * wbytes
                        + (H + H + 2 * A) * 4),
    )

    mean, log_std = pl.pallas_call(
        policy_kernel,
        out_shape=(jax.ShapeDtypeStruct((B, A), jnp.float32),
                   jax.ShapeDtypeStruct((B, A), jnp.float32)),
        grid=grid,
        in_specs=[
            pl.BlockSpec((tb, S), lambda i: (i, 0)),       # x: tiled over batch
            resident(w1c), resident(b1f),
            resident(w2c), resident(b2f),
            resident(wmc), resident(bmf),
            resident(wsc), resident(bsf),
        ],
        out_specs=(pl.BlockSpec((tb, A), lambda i: (i, 0)),
                   pl.BlockSpec((tb, A), lambda i: (i, 0))),
        compiler_params=pltpu.CompilerParams(
            dimension_semantics=("parallel",),
            vmem_limit_bytes=vmem_limit_bytes),
        cost_estimate=cost,
    )(x, w1c, b1f, w2c, b2f, wmc, bmf, wsc, bsf)

    return mean, log_std


def init_linear(key, in_dim, out_dim):
    """Deterministic init mimicking torch.nn.Linear default (+/- 1/sqrt(in))."""
    kw, kb = jax.random.split(key)
    bound = 1.0 / math.sqrt(in_dim)
    # Stored as (in, out) so the kernel computes x @ W.
    w = jax.random.uniform(kw, (in_dim, out_dim), jnp.float32, -bound, bound)
    b = jax.random.uniform(kb, (1, out_dim), jnp.float32, -bound, bound)
    return w, b


def reference_forward(x, params):
    """Plain-JAX reference mirroring the PyTorch forward."""
    w1, b1, w2, b2, wm, bm, ws, bs = params
    h1 = jnp.maximum(x @ w1 + b1, 0.0)
    h2 = jnp.maximum(h1 @ w2 + b2, 0.0)
    mean_raw = h2 @ wm + bm
    log_std = jnp.tanh(h2 @ ws + bs)
    mean = jnp.concatenate(
        [jnp.tanh(mean_raw[:, :1]), jax.nn.sigmoid(mean_raw[:, 1:])], axis=1)
    return mean, log_std


if __name__ == "__main__":
    state_dim = 16
    action_dim = 4

    key = jax.random.PRNGKey(0)
    kx, k1, k2, km, ks, kx2, kx3 = jax.random.split(key, 7)

    w1, b1 = init_linear(k1, state_dim, 64)
    w2, b2 = init_linear(k2, 64, 64)
    wm, bm = init_linear(km, 64, action_dim)
    ws, bs = init_linear(ks, 64, action_dim)
    params = (w1, b1, w2, b2, wm, bm, ws, bs)

    # 1) Small batch: single grid step.
    x_small = jax.random.normal(kx, (8, state_dim), jnp.float32)
    mean, log_std = policy_forward(x_small, params)
    jax.block_until_ready((mean, log_std))
    ref_mean, ref_log_std = reference_forward(x_small, params)
    assert mean.shape == (8, action_dim) and log_std.shape == (8, action_dim)
    assert jnp.allclose(mean, ref_mean, atol=1e-5, rtol=1e-5)
    assert jnp.allclose(log_std, ref_log_std, atol=1e-5, rtol=1e-5)

    # 2) Batch not a multiple of the tile (or of 8): exercises the ragged last
    #    block (no wrapper-side padding) and weight residency across a
    #    multi-step parallel grid.
    x_rag = jax.random.normal(kx2, (37, state_dim), jnp.float32)
    mean2, log_std2 = policy_forward(x_rag, params, block_batch=16)
    jax.block_until_ready((mean2, log_std2))
    ref_mean2, ref_log_std2 = reference_forward(x_rag, params)
    assert mean2.shape == (37, action_dim)
    assert jnp.allclose(mean2, ref_mean2, atol=1e-5, rtol=1e-5)
    assert jnp.allclose(log_std2, ref_log_std2, atol=1e-5, rtol=1e-5)

    # 3) Larger batch on the default tile: exercises the dual-TC tile cap
    #    (>= 2 grid steps) and the raised VMEM limit.
    x_big = jax.random.normal(kx3, (5000, state_dim), jnp.float32)
    mean3, log_std3 = policy_forward(x_big, params)
    jax.block_until_ready((mean3, log_std3))
    ref_mean3, ref_log_std3 = reference_forward(x_big, params)
    assert jnp.allclose(mean3, ref_mean3, atol=1e-5, rtol=1e-5)
    assert jnp.allclose(log_std3, ref_log_std3, atol=1e-5, rtol=1e-5)

    # 4) bf16 MXU-input path (accumulation stays f32): looser tolerance.
    mean4, log_std4 = policy_forward(x_small, params,
                                     compute_dtype=jnp.bfloat16)
    jax.block_until_ready((mean4, log_std4))
    assert jnp.allclose(mean4, ref_mean, atol=5e-2, rtol=5e-2)
    assert jnp.allclose(log_std4, ref_log_std, atol=5e-2, rtol=5e-2)

    print("KERNEL_OK")
</pallas_src>

<mosaic_0001>
module attributes {stable_mosaic.version = 11 : i64} {
  func.func @policy_kernel(%arg0: i32, %arg1: memref<8x16xf32, #tpu.memory_space<vmem>>, %arg2: memref<16x64xf32, #tpu.memory_space<vmem>>, %arg3: memref<1x64xf32, #tpu.memory_space<vmem>>, %arg4: memref<64x64xf32, #tpu.memory_space<vmem>>, %arg5: memref<1x64xf32, #tpu.memory_space<vmem>>, %arg6: memref<64x4xf32, #tpu.memory_space<vmem>>, %arg7: memref<1x4xf32, #tpu.memory_space<vmem>>, %arg8: memref<64x4xf32, #tpu.memory_space<vmem>>, %arg9: memref<1x4xf32, #tpu.memory_space<vmem>>, %arg10: memref<8x4xf32, #tpu.memory_space<vmem>>, %arg11: memref<8x4xf32, #tpu.memory_space<vmem>>) attributes {dimension_semantics = [#tpu.dimension_semantics<parallel>], iteration_bounds = array<i64: 1>, scalar_prefetch = 0 : i64, scratch_operands = 0 : i64, tpu.core_type = #tpu.core_type<tc>, window_params = [{transform_indices = @transform_0, window_bounds = array<i64: 8, 16>}, {pipeline_mode = #tpu.pipeline_mode<synchronous>, transform_indices = @transform_1, window_bounds = array<i64: 16, 64>}, {pipeline_mode = #tpu.pipeline_mode<synchronous>, transform_indices = @transform_2, window_bounds = array<i64: 1, 64>}, {pipeline_mode = #tpu.pipeline_mode<synchronous>, transform_indices = @transform_3, window_bounds = array<i64: 64, 64>}, {pipeline_mode = #tpu.pipeline_mode<synchronous>, transform_indices = @transform_4, window_bounds = array<i64: 1, 64>}, {pipeline_mode = #tpu.pipeline_mode<synchronous>, transform_indices = @transform_5, window_bounds = array<i64: 64, 4>}, {pipeline_mode = #tpu.pipeline_mode<synchronous>, transform_indices = @transform_6, window_bounds = array<i64: 1, 4>}, {pipeline_mode = #tpu.pipeline_mode<synchronous>, transform_indices = @transform_7, window_bounds = array<i64: 64, 4>}, {pipeline_mode = #tpu.pipeline_mode<synchronous>, transform_indices = @transform_8, window_bounds = array<i64: 1, 4>}, {transform_indices = @transform_9, window_bounds = array<i64: 8, 4>}, {transform_indices = @transform_10, window_bounds = array<i64: 8, 4>}]} {
    %c0 = arith.constant 0 : index
    %c0_0 = arith.constant 0 : index
    %0 = vector.load %arg1[%c0, %c0_0] : memref<8x16xf32, #tpu.memory_space<vmem>>, vector<8x16xf32>
    %c0_1 = arith.constant 0 : index
    %c0_2 = arith.constant 0 : index
    %1 = vector.load %arg2[%c0_1, %c0_2] : memref<16x64xf32, #tpu.memory_space<vmem>>, vector<16x64xf32>
    %cst = arith.constant dense<0.000000e+00> : vector<8x64xf32>
    %2 = tpu.matmul %0, %1, %cst {dimension_numbers = #tpu.dot_dimension_numbers<[1], [0], [0], [1], [0, 0, 1, 1], [], []>} : vector<8x16xf32>, vector<16x64xf32>, vector<8x64xf32> -> vector<8x64xf32>
    %c0_3 = arith.constant 0 : index
    %c0_4 = arith.constant 0 : index
    %3 = vector.load %arg3[%c0_3, %c0_4] : memref<1x64xf32, #tpu.memory_space<vmem>>, vector<1x64xf32>
    %4 = vector.broadcast %3 : vector<1x64xf32> to vector<8x64xf32>
    %5 = arith.addf %2, %4 : vector<8x64xf32>
    %cst_5 = arith.constant 0.000000e+00 : f32
    %6 = vector.broadcast %cst_5 : f32 to vector<8x64xf32>
    %7 = arith.maximumf %5, %6 : vector<8x64xf32>
    %c0_6 = arith.constant 0 : index
    %c0_7 = arith.constant 0 : index
    %8 = vector.load %arg4[%c0_6, %c0_7] : memref<64x64xf32, #tpu.memory_space<vmem>>, vector<64x64xf32>
    %cst_8 = arith.constant dense<0.000000e+00> : vector<8x64xf32>
    %9 = tpu.matmul %7, %8, %cst_8 {dimension_numbers = #tpu.dot_dimension_numbers<[1], [0], [0], [1], [0, 0, 1, 1], [], []>} : vector<8x64xf32>, vector<64x64xf32>, vector<8x64xf32> -> vector<8x64xf32>
    %c0_9 = arith.constant 0 : index
    %c0_10 = arith.constant 0 : index
    %10 = vector.load %arg5[%c0_9, %c0_10] : memref<1x64xf32, #tpu.memory_space<vmem>>, vector<1x64xf32>
    %11 = vector.broadcast %10 : vector<1x64xf32> to vector<8x64xf32>
    %12 = arith.addf %9, %11 : vector<8x64xf32>
    %cst_11 = arith.constant 0.000000e+00 : f32
    %13 = vector.broadcast %cst_11 : f32 to vector<8x64xf32>
    %14 = arith.maximumf %12, %13 : vector<8x64xf32>
    %c0_12 = arith.constant 0 : index
    %c0_13 = arith.constant 0 : index
    %15 = vector.load %arg6[%c0_12, %c0_13] : memref<64x4xf32, #tpu.memory_space<vmem>>, vector<64x4xf32>
    %cst_14 = arith.constant dense<0.000000e+00> : vector<8x4xf32>
    %16 = tpu.matmul %14, %15, %cst_14 {dimension_numbers = #tpu.dot_dimension_numbers<[1], [0], [0], [1], [0, 0, 1, 1], [], []>} : vector<8x64xf32>, vector<64x4xf32>, vector<8x4xf32> -> vector<8x4xf32>
    %c0_15 = arith.constant 0 : index
    %c0_16 = arith.constant 0 : index
    %17 = vector.load %arg7[%c0_15, %c0_16] : memref<1x4xf32, #tpu.memory_space<vmem>>, vector<1x4xf32>
    %18 = vector.broadcast %17 : vector<1x4xf32> to vector<8x4xf32>
    %19 = arith.addf %16, %18 : vector<8x4xf32>
    %c0_17 = arith.constant 0 : index
    %c0_18 = arith.constant 0 : index
    %20 = vector.load %arg8[%c0_17, %c0_18] : memref<64x4xf32, #tpu.memory_space<vmem>>, vector<64x4xf32>
    %cst_19 = arith.constant dense<0.000000e+00> : vector<8x4xf32>
    %21 = tpu.matmul %14, %20, %cst_19 {dimension_numbers = #tpu.dot_dimension_numbers<[1], [0], [0], [1], [0, 0, 1, 1], [], []>} : vector<8x64xf32>, vector<64x4xf32>, vector<8x4xf32> -> vector<8x4xf32>
    %c0_20 = arith.constant 0 : index
    %c0_21 = arith.constant 0 : index
    %22 = vector.load %arg9[%c0_20, %c0_21] : memref<1x4xf32, #tpu.memory_space<vmem>>, vector<1x4xf32>
    %23 = vector.broadcast %22 : vector<1x4xf32> to vector<8x4xf32>
    %24 = arith.addf %21, %23 : vector<8x4xf32>
    %25 = tpu.iota {dimensions = array<i32: 1>} : vector<8x4xi32>
    %c0_i32 = arith.constant 0 : i32
    %26 = vector.broadcast %c0_i32 : i32 to vector<8x4xi32>
    %27 = arith.cmpi eq, %25, %26 : vector<8x4xi32>
    %28 = math.tanh %19 : vector<8x4xf32>
    %29 = arith.negf %19 : vector<8x4xf32>
    %30 = math.exp %29 : vector<8x4xf32>
    %cst_22 = arith.constant 1.000000e+00 : f32
    %31 = vector.broadcast %cst_22 : f32 to vector<8x4xf32>
    %32 = arith.addf %31, %30 : vector<8x4xf32>
    %33 = arith.divf %31, %32 : vector<8x4xf32>
    %34 = arith.select %27, %28, %33 : vector<8x4xi1>, vector<8x4xf32>
    %c0_23 = arith.constant 0 : index
    %c0_24 = arith.constant 0 : index
    %35 = vector.load %arg10[%c0_23, %c0_24] : memref<8x4xf32, #tpu.memory_space<vmem>>, vector<8x4xf32>
    tpu.vector_store %arg10[%c0_23, %c0_24], %34 {strides = array<i32>} : memref<8x4xf32, #tpu.memory_space<vmem>>, vector<8x4xf32>,
    %36 = math.tanh %24 : vector<8x4xf32>
    %c0_25 = arith.constant 0 : index
    %c0_26 = arith.constant 0 : index
    %37 = vector.load %arg11[%c0_25, %c0_26] : memref<8x4xf32, #tpu.memory_space<vmem>>, vector<8x4xf32>
    tpu.vector_store %arg11[%c0_25, %c0_26], %36 {strides = array<i32>} : memref<8x4xf32, #tpu.memory_space<vmem>>, vector<8x4xf32>,
    return
  }
  func.func @transform_0(%arg0: i32) -> (i32, i32) {
    %c0_i32 = arith.constant 0 : i32
    %c0_i32_0 = arith.constant 0 : i32
    return %arg0, %c0_i32 : i32, i32
  }
  func.func @transform_1(%arg0: i32) -> (i32, i32) {
    %c0_i32 = arith.constant 0 : i32
    %c0_i32_0 = arith.constant 0 : i32
    %c0_i32_1 = arith.constant 0 : i32
    return %c0_i32, %c0_i32_0 : i32, i32
  }
  func.func @transform_2(%arg0: i32) -> (i32, i32) {
    %c0_i32 = arith.constant 0 : i32
    %c0_i32_0 = arith.constant 0 : i32
    %c0_i32_1 = arith.constant 0 : i32
    return %c0_i32, %c0_i32_0 : i32, i32
  }
  func.func @transform_3(%arg0: i32) -> (i32, i32) {
    %c0_i32 = arith.constant 0 : i32
    %c0_i32_0 = arith.constant 0 : i32
    %c0_i32_1 = arith.constant 0 : i32
    return %c0_i32, %c0_i32_0 : i32, i32
  }
  func.func @transform_4(%arg0: i32) -> (i32, i32) {
    %c0_i32 = arith.constant 0 : i32
    %c0_i32_0 = arith.constant 0 : i32
    %c0_i32_1 = arith.constant 0 : i32
    return %c0_i32, %c0_i32_0 : i32, i32
  }
  func.func @transform_5(%arg0: i32) -> (i32, i32) {
    %c0_i32 = arith.constant 0 : i32
    %c0_i32_0 = arith.constant 0 : i32
    %c0_i32_1 = arith.constant 0 : i32
    return %c0_i32, %c0_i32_0 : i32, i32
  }
  func.func @transform_6(%arg0: i32) -> (i32, i32) {
    %c0_i32 = arith.constant 0 : i32
    %c0_i32_0 = arith.constant 0 : i32
    %c0_i32_1 = arith.constant 0 : i32
    return %c0_i32, %c0_i32_0 : i32, i32
  }
  func.func @transform_7(%arg0: i32) -> (i32, i32) {
    %c0_i32 = arith.constant 0 : i32
    %c0_i32_0 = arith.constant 0 : i32
    %c0_i32_1 = arith.constant 0 : i32
    return %c0_i32, %c0_i32_0 : i32, i32
  }
  func.func @transform_8(%arg0: i32) -> (i32, i32) {
    %c0_i32 = arith.constant 0 : i32
    %c0_i32_0 = arith.constant 0 : i32
    %c0_i32_1 = arith.constant 0 : i32
    return %c0_i32, %c0_i32_0 : i32, i32
  }
  func.func @transform_9(%arg0: i32) -> (i32, i32) {
    %c0_i32 = arith.constant 0 : i32
    %c0_i32_0 = arith.constant 0 : i32
    return %arg0, %c0_i32 : i32, i32
  }
  func.func @transform_10(%arg0: i32) -> (i32, i32) {
    %c0_i32 = arith.constant 0 : i32
    %c0_i32_0 = arith.constant 0 : i32
    return %arg0, %c0_i32 : i32, i32
  }
}

</mosaic_0001>

<llo_original>
// kernel: tpu_custom_call.1
$region0: #{tpu_custom_call.1}
  #allocation0 [shape = 'u32[]', space=smem, size = 0x4, offset = 0x4, fixed_abs, tag = 'smem constant byte address 0x4 - core index']
  #allocation1 [shape = 'u32[144,128]{1,0:T(1,128)}', space=vmem, size = 0x12000, scoped, tag = 'internal scratch']
  %s0 = inlined_call_operand.vmem [shape: f32[8,16], index: 0, kind: input, shape index: {}]
  %s1 = inlined_call_operand.vmem [shape: f32[16,64], index: 1, kind: input, shape index: {}]
  %s2 = inlined_call_operand.vmem [shape: f32[1,64], index: 2, kind: input, shape index: {}]
  %s3 = inlined_call_operand.vmem [shape: f32[64,64], index: 3, kind: input, shape index: {}]
  %s4 = inlined_call_operand.vmem [shape: f32[1,64], index: 4, kind: input, shape index: {}]
  %s5 = inlined_call_operand.vmem [shape: f32[64,4], index: 5, kind: input, shape index: {}]
  %s6 = inlined_call_operand.vmem [shape: f32[1,4], index: 6, kind: input, shape index: {}]
  %s7 = inlined_call_operand.vmem [shape: f32[64,4], index: 7, kind: input, shape index: {}]
  %s8 = inlined_call_operand.vmem [shape: f32[1,4], index: 8, kind: input, shape index: {}]
  %s9 = inlined_call_operand.vmem [shape: f32[8,4], index: 9, kind: output, shape index: {0}]
  %s10 = inlined_call_operand.vmem [shape: f32[8,4], index: 10, kind: output, shape index: {1}]
  %11 = xla_tuple %s9, %s10
  %s12 = sld [smem:[#allocation0]]
  $region54: #{tpu_custom_call.1} parent=0
    _
  %s14 = ssub.s32 1, %s12
  %s15 = scalar_select 0, %s14, %s12
  // Predicated region
  $region2: #{tpu_custom_call.1} parent=0 // pred_check
    _
  $region3: #{tpu_custom_call.1} parent=0 // pred_check_branch
    %17 = sbr.rel (0) target = $region5
  $region4: #{tpu_custom_call.1} parent=0 // pred_region
    _
  $region5: #{tpu_custom_call.1} parent=0 // pred_fallthru
    _
  // Predicated region
  $region6: #{tpu_custom_call.1} parent=0 // pred_check
    _
  $region7: #{tpu_custom_call.1} parent=0 // pred_check_branch
    %19 = sbr.rel (0) target = $region9
  $region8: #{tpu_custom_call.1} parent=0 // pred_region
    _
  $region9: #{tpu_custom_call.1} parent=0 // pred_fallthru
    _
  // Predicated region
  $region10: #{tpu_custom_call.1} parent=0 // pred_check
    _
  $region11: #{tpu_custom_call.1} parent=0 // pred_check_branch
    %21 = sbr.rel (0) target = $region13
  $region12: #{tpu_custom_call.1} parent=0 // pred_region
    _
  $region13: #{tpu_custom_call.1} parent=0 // pred_fallthru
    _
  // Predicated region
  $region14: #{tpu_custom_call.1} parent=0 // pred_check
    _
  $region15: #{tpu_custom_call.1} parent=0 // pred_check_branch
    %23 = sbr.rel (0) target = $region17
  $region16: #{tpu_custom_call.1} parent=0 // pred_region
    _
  $region17: #{tpu_custom_call.1} parent=0 // pred_fallthru
    _
  // Predicated region
  $region18: #{tpu_custom_call.1} parent=0 // pred_check
    _
  $region19: #{tpu_custom_call.1} parent=0 // pred_check_branch
    %25 = sbr.rel (0) target = $region21
  $region20: #{tpu_custom_call.1} parent=0 // pred_region
    _
  $region21: #{tpu_custom_call.1} parent=0 // pred_fallthru
    _
  // Predicated region
  $region22: #{tpu_custom_call.1} parent=0 // pred_check
    _
  $region23: #{tpu_custom_call.1} parent=0 // pred_check_branch
    %27 = sbr.rel (0) target = $region25
  $region24: #{tpu_custom_call.1} parent=0 // pred_region
    _
  $region25: #{tpu_custom_call.1} parent=0 // pred_fallthru
    _
  // Predicated region
  $region26: #{tpu_custom_call.1} parent=0 // pred_check
    _
  $region27: #{tpu_custom_call.1} parent=0 // pred_check_branch
    %29 = sbr.rel (0) target = $region29
  $region28: #{tpu_custom_call.1} parent=0 // pred_region
    _
  $region29: #{tpu_custom_call.1} parent=0 // pred_fallthru
    _
  // Predicated region
  $region30: #{tpu_custom_call.1} parent=0 // pred_check
    _
  $region31: #{tpu_custom_call.1} parent=0 // pred_check_branch
    %31 = sbr.rel (0) target = $region33
  $region32: #{tpu_custom_call.1} parent=0 // pred_region
    _
  $region33: #{tpu_custom_call.1} parent=0 // pred_fallthru
    _
  // Predicated region
  $region34: #{tpu_custom_call.1} parent=0 // pred_check
    _
  $region35: #{tpu_custom_call.1} parent=0 // pred_check_branch
    %33 = sbr.rel (0) target = $region37
  $region36: #{tpu_custom_call.1} parent=0 // pred_region
    _
  $region37: #{tpu_custom_call.1} parent=0 // pred_fallthru
    _
  %v34 = vld [vmem:[%s0] sm:$0xff]
  %v35 = vld [vmem:[%s1] sm:$0xff]
  %v36 = vld [vmem:[%s1 + $0x8] sm:$0xff]
  %v37 = vld [vmem:[%s2] sm:$0x1]
  %v39 = vlaneseq
  %v40 = vshrl.u32 %v39, 7
  %v41 = vsub.s32 0, %v40
  %v42 = vrot.slane %v37, %v41
  %vm44 = vcmask 130048
  %v46 = vsel %vm44, %v34, 0
  %48 = vmatprep.subr.mxu0 0.0
  %49 = vmatpush1.msra.mxu0 0.0
  %50 = vmatprep.subr.mxu0 0.0
  %51 = vmatpush1.msra.mxu0 0.0
  %52 = vmatprep.subr.mxu0 0.0
  %53 = vmatpush1.msra.mxu0 0.0
  %54 = vmatprep.subr.mxu0 0.0
  %55 = vmatpush1.msra.mxu0 0.0
  %56 = vmatprep.subr.mxu0 0.0
  %57 = vmatpush1.msra.mxu0 0.0
  %58 = vmatprep.subr.mxu0 0.0
  %59 = vmatpush1.msra.mxu0 0.0
  %60 = vmatprep.subr.mxu0 0.0
  %61 = vmatpush1.msra.mxu0 0.0
  %62 = vmatprep.subr.mxu0 0.0
  %63 = vmatpush1.msra.mxu0 0.0
  %64 = vmatprep.subr.mxu0 0.0
  %65 = vmatpush1.msra.mxu0 0.0
  %66 = vmatprep.subr.mxu0 0.0
  %67 = vmatpush1.msra.mxu0 0.0
  %68 = vmatprep.subr.mxu0 0.0
  %69 = vmatpush1.msra.mxu0 0.0
  %70 = vmatprep.subr.mxu0 0.0
  %71 = vmatpush1.msra.mxu0 0.0
  %72 = vmatprep.subr.mxu0 0.0
  %73 = vmatpush1.msra.mxu0 0.0
  %74 = vmatprep.subr.mxu0 0.0
  %75 = vmatpush1.msra.mxu0 0.0
  %76 = vmatprep.subr.mxu0 0.0
  %77 = vmatpush1.msra.mxu0 %v36
  %78 = vmatprep.subr.mxu0 0.0
  %79 = vmatpush1.msra.mxu0 %v35
  %80 = vmatprep.subr.mxu0 0.0
  %81 = vmatpush2.msra.mxu0 0.0
  %82 = vmatprep.subr.mxu0 0.0
  %83 = vmatpush2.msra.mxu0 0.0
  %84 = vmatprep.subr.mxu0 0.0
  %85 = vmatpush2.msra.mxu0 0.0
  %86 = vmatprep.subr.mxu0 0.0
  %87 = vmatpush2.msra.mxu0 0.0
  %88 = vmatprep.subr.mxu0 0.0
  %89 = vmatpush2.msra.mxu0 0.0
  %90 = vmatprep.subr.mxu0 0.0
  %91 = vmatpush2.msra.mxu0 0.0
  %92 = vmatprep.subr.mxu0 0.0
  %93 = vmatpush2.msra.mxu0 0.0
  %94 = vmatprep.subr.mxu0 0.0
  %95 = vmatpush2.msra.mxu0 0.0
  %96 = vmatprep.subr.mxu0 0.0
  %97 = vmatpush2.msra.mxu0 0.0
  %98 = vmatprep.subr.mxu0 0.0
  %99 = vmatpush2.msra.mxu0 0.0
  %100 = vmatprep.subr.mxu0 0.0
  %101 = vmatpush2.msra.mxu0 0.0
  %102 = vmatprep.subr.mxu0 0.0
  %103 = vmatpush2.msra.mxu0 0.0
  %104 = vmatprep.subr.mxu0 0.0
  %105 = vmatpush2.msra.mxu0 0.0
  %106 = vmatprep.subr.mxu0 0.0
  %107 = vmatpush2.msra.mxu0 0.0
  %108 = vmatprep.subr.mxu0 0.0
  %109 = vmatpush2.msra.mxu0 0.0
  %110 = vmatprep.subr.mxu0 0.0
  %111 = vmatpush2.msra.mxu0 0.0
  %112 = vmatprep.mubr.f32.mxu0 0.0
  %113 = vmatmul.mubr.f32.gmra.mxu0 %v46
  %v114 = vpop.f32.mrf.mxu0
  %v115 = vadd.f32 %v42, %v114
  %v116 = vpop.f32.mrf.mxu0
  %117 = vdwg.mxu0
  %v118 = vmax.f32 %v115, 0.0
  %v119 = vld [vmem:[%s3] sm:$0xff]
  %v120 = vld [vmem:[%s3 + $0x8] sm:$0xff]
  %v121 = vld [vmem:[%s3 + $0x10] sm:$0xff]
  %v122 = vld [vmem:[%s3 + $0x18] sm:$0xff]
  %v123 = vld [vmem:[%s3 + $0x20] sm:$0xff]
  %v124 = vld [vmem:[%s3 + $0x28] sm:$0xff]
  %v125 = vld [vmem:[%s3 + $0x30] sm:$0xff]
  %v126 = vld [vmem:[%s3 + $0x38] sm:$0xff]
  %v127 = vld [vmem:[%s4] sm:$0x1]
  %v129 = vlaneseq
  %v130 = vshrl.u32 %v129, 7
  %v131 = vsub.s32 0, %v130
  %v132 = vrot.slane %v127, %v131
  %vm134 = vcmask 523264
  %v136 = vsel %vm134, %v118, 0
  %138 = vmatprep.subr.mxu0 0.0
  %139 = vmatpush1.msra.mxu0 0.0
  %140 = vmatprep.subr.mxu0 0.0
  %141 = vmatpush1.msra.mxu0 0.0
  %142 = vmatprep.subr.mxu0 0.0
  %143 = vmatpush1.msra.mxu0 0.0
  %144 = vmatprep.subr.mxu0 0.0
  %145 = vmatpush1.msra.mxu0 0.0
  %146 = vmatprep.subr.mxu0 0.0
  %147 = vmatpush1.msra.mxu0 0.0
  %148 = vmatprep.subr.mxu0 0.0
  %149 = vmatpush1.msra.mxu0 0.0
  %150 = vmatprep.subr.mxu0 0.0
  %151 = vmatpush1.msra.mxu0 0.0
  %152 = vmatprep.subr.mxu0 0.0
  %153 = vmatpush1.msra.mxu0 0.0
  %154 = vmatprep.subr.mxu0 0.0
  %155 = vmatpush1.msra.mxu0 %v126
  %156 = vmatprep.subr.mxu0 0.0
  %157 = vmatpush1.msra.mxu0 %v125
  %158 = vmatprep.subr.mxu0 0.0
  %159 = vmatpush1.msra.mxu0 %v124
  %160 = vmatprep.subr.mxu0 0.0
  %161 = vmatpush1.msra.mxu0 %v123
  %162 = vmatprep.subr.mxu0 0.0
  %163 = vmatpush1.msra.mxu0 %v122
  %164 = vmatprep.subr.mxu0 0.0
  %165 = vmatpush1.msra.mxu0 %v121
  %166 = vmatprep.subr.mxu0 0.0
  %167 = vmatpush1.msra.mxu0 %v120
  %168 = vmatprep.subr.mxu0 0.0
  %169 = vmatpush1.msra.mxu0 %v119
  %170 = vmatprep.subr.mxu0 0.0
  %171 = vmatpush2.msra.mxu0 0.0
  %172 = vmatprep.subr.mxu0 0.0
  %173 = vmatpush2.msra.mxu0 0.0
  %174 = vmatprep.subr.mxu0 0.0
  %175 = vmatpush2.msra.mxu0 0.0
  %176 = vmatprep.subr.mxu0 0.0
  %177 = vmatpush2.msra.mxu0 0.0
  %178 = vmatprep.subr.mxu0 0.0
  %179 = vmatpush2.msra.mxu0 0.0
  %180 = vmatprep.subr.mxu0 0.0
  %181 = vmatpush2.msra.mxu0 0.0
  %182 = vmatprep.subr.mxu0 0.0
  %183 = vmatpush2.msra.mxu0 0.0
  %184 = vmatprep.subr.mxu0 0.0
  %185 = vmatpush2.msra.mxu0 0.0
  %186 = vmatprep.subr.mxu0 0.0
  %187 = vmatpush2.msra.mxu0 0.0
  %188 = vmatprep.subr.mxu0 0.0
  %189 = vmatpush2.msra.mxu0 0.0
  %190 = vmatprep.subr.mxu0 0.0
  %191 = vmatpush2.msra.mxu0 0.0
  %192 = vmatprep.subr.mxu0 0.0
  %193 = vmatpush2.msra.mxu0 0.0
  %194 = vmatprep.subr.mxu0 0.0
  %195 = vmatpush2.msra.mxu0 0.0
  %196 = vmatprep.subr.mxu0 0.0
  %197 = vmatpush2.msra.mxu0 0.0
  %198 = vmatprep.subr.mxu0 0.0
  %199 = vmatpush2.msra.mxu0 0.0
  %200 = vmatprep.subr.mxu0 0.0
  %201 = vmatpush2.msra.mxu0 0.0
  %202 = vmatprep.mubr.f32.mxu0 0.0
  %203 = vmatmul.mubr.f32.gmra.mxu0 %v136
  %v204 = vpop.f32.mrf.mxu0
  %v205 = vadd.f32 %v132, %v204
  %v206 = vpop.f32.mrf.mxu0
  %207 = vdwg.mxu0
  %v208 = vmax.f32 %v205, 0.0
  %v209 = vld [vmem:[%s5] sm:$0xff]
  %v210 = vld [vmem:[%s5 + $0x8] sm:$0xff]
  %v211 = vld [vmem:[%s5 + $0x10] sm:$0xff]
  %v212 = vld [vmem:[%s5 + $0x18] sm:$0xff]
  %v213 = vld [vmem:[%s5 + $0x20] sm:$0xff]
  %v214 = vld [vmem:[%s5 + $0x28] sm:$0xff]
  %v215 = vld [vmem:[%s5 + $0x30] sm:$0xff]
  %v216 = vld [vmem:[%s5 + $0x38] sm:$0xff]
  %v217 = vld [vmem:[%s6] sm:$0x1]
  %v219 = vlaneseq
  %v220 = vshrl.u32 %v219, 7
  %v221 = vsub.s32 0, %v220
  %v222 = vrot.slane %v217, %v221
  %v225 = vsel %vm134, %v208, 0
  %227 = vmatprep.subr.mxu0 0.0
  %228 = vmatpush1.msra.mxu0 0.0
  %229 = vmatprep.subr.mxu0 0.0
  %230 = vmatpush1.msra.mxu0 0.0
  %231 = vmatprep.subr.mxu0 0.0
  %232 = vmatpush1.msra.mxu0 0.0
  %233 = vmatprep.subr.mxu0 0.0
  %234 = vmatpush1.msra.mxu0 0.0
  %235 = vmatprep.subr.mxu0 0.0
  %236 = vmatpush1.msra.mxu0 0.0
  %237 = vmatprep.subr.mxu0 0.0
  %238 = vmatpush1.msra.mxu0 0.0
  %239 = vmatprep.subr.mxu0 0.0
  %240 = vmatpush1.msra.mxu0 0.0
  %241 = vmatprep.subr.mxu0 0.0
  %242 = vmatpush1.msra.mxu0 0.0
  %243 = vmatprep.subr.mxu0 0.0
  %244 = vmatpush1.msra.mxu0 %v216
  %245 = vmatprep.subr.mxu0 0.0
  %246 = vmatpush1.msra.mxu0 %v215
  %247 = vmatprep.subr.mxu0 0.0
  %248 = vmatpush1.msra.mxu0 %v214
  %249 = vmatprep.subr.mxu0 0.0
  %250 = vmatpush1.msra.mxu0 %v213
  %251 = vmatprep.subr.mxu0 0.0
  %252 = vmatpush1.msra.mxu0 %v212
  %253 = vmatprep.subr.mxu0 0.0
  %254 = vmatpush1.msra.mxu0 %v211
  %255 = vmatprep.subr.mxu0 0.0
  %256 = vmatpush1.msra.mxu0 %v210
  %257 = vmatprep.subr.mxu0 0.0
  %258 = vmatpush1.msra.mxu0 %v209
  %259 = vmatprep.subr.mxu0 0.0
  %260 = vmatpush2.msra.mxu0 0.0
  %261 = vmatprep.subr.mxu0 0.0
  %262 = vmatpush2.msra.mxu0 0.0
  %263 = vmatprep.subr.mxu0 0.0
  %264 = vmatpush2.msra.mxu0 0.0
  %265 = vmatprep.subr.mxu0 0.0
  %266 = vmatpush2.msra.mxu0 0.0
  %267 = vmatprep.subr.mxu0 0.0
  %268 = vmatpush2.msra.mxu0 0.0
  %269 = vmatprep.subr.mxu0 0.0
  %270 = vmatpush2.msra.mxu0 0.0
  %271 = vmatprep.subr.mxu0 0.0
  %272 = vmatpush2.msra.mxu0 0.0
  %273 = vmatprep.subr.mxu0 0.0
  %274 = vmatpush2.msra.mxu0 0.0
  %275 = vmatprep.subr.mxu0 0.0
  %276 = vmatpush2.msra.mxu0 0.0
  %277 = vmatprep.subr.mxu0 0.0
  %278 = vmatpush2.msra.mxu0 0.0
  %279 = vmatprep.subr.mxu0 0.0
  %280 = vmatpush2.msra.mxu0 0.0
  %281 = vmatprep.subr.mxu0 0.0
  %282 = vmatpush2.msra.mxu0 0.0
  %283 = vmatprep.subr.mxu0 0.0
  %284 = vmatpush2.msra.mxu0 0.0
  %285 = vmatprep.subr.mxu0 0.0
  %286 = vmatpush2.msra.mxu0 0.0
  %287 = vmatprep.subr.mxu0 0.0
  %288 = vmatpush2.msra.mxu0 0.0
  %289 = vmatprep.subr.mxu0 0.0
  %290 = vmatpush2.msra.mxu0 0.0
  %291 = vmatprep.mubr.f32.mxu0 0.0
  %292 = vmatmul.mubr.f32.gmra.mxu0 %v225
  %v293 = vpop.f32.mrf.mxu0
  %v294 = vadd.f32 %v222, %v293
  %v295 = vpop.f32.mrf.mxu0
  %296 = vdwg.mxu0
  %v297 = vld [vmem:[%s7] sm:$0xff]
  %v298 = vld [vmem:[%s7 + $0x8] sm:$0xff]
  %v299 = vld [vmem:[%s7 + $0x10] sm:$0xff]
  %v300 = vld [vmem:[%s7 + $0x18] sm:$0xff]
  %v301 = vld [vmem:[%s7 + $0x20] sm:$0xff]
  %v302 = vld [vmem:[%s7 + $0x28] sm:$0xff]
  %v303 = vld [vmem:[%s7 + $0x30] sm:$0xff]
  %v304 = vld [vmem:[%s7 + $0x38] sm:$0xff]
  %v305 = vld [vmem:[%s8] sm:$0x1]
  %v307 = vlaneseq
  %v308 = vshrl.u32 %v307, 7
  %v309 = vsub.s32 0, %v308
  %v310 = vrot.slane %v305, %v309
  %312 = vmatprep.subr.mxu0 0.0
  %313 = vmatpush1.msra.mxu0 0.0
  %314 = vmatprep.subr.mxu0 0.0
  %315 = vmatpush1.msra.mxu0 0.0
  %316 = vmatprep.subr.mxu0 0.0
  %317 = vmatpush1.msra.mxu0 0.0
  %318 = vmatprep.subr.mxu0 0.0
  %319 = vmatpush1.msra.mxu0 0.0
  %320 = vmatprep.subr.mxu0 0.0
  %321 = vmatpush1.msra.mxu0 0.0
  %322 = vmatprep.subr.mxu0 0.0
  %323 = vmatpush1.msra.mxu0 0.0
  %324 = vmatprep.subr.mxu0 0.0
  %325 = vmatpush1.msra.mxu0 0.0
  %326 = vmatprep.subr.mxu0 0.0
  %327 = vmatpush1.msra.mxu0 0.0
  %328 = vmatprep.subr.mxu0 0.0
  %329 = vmatpush1.msra.mxu0 %v304
  %330 = vmatprep.subr.mxu0 0.0
  %331 = vmatpush1.msra.mxu0 %v303
  %332 = vmatprep.subr.mxu0 0.0
  %333 = vmatpush1.msra.mxu0 %v302
  %334 = vmatprep.subr.mxu0 0.0
  %335 = vmatpush1.msra.mxu0 %v301
  %336 = vmatprep.subr.mxu0 0.0
  %337 = vmatpush1.msra.mxu0 %v300
  %338 = vmatprep.subr.mxu0 0.0
  %339 = vmatpush1.msra.mxu0 %v299
  %340 = vmatprep.subr.mxu0 0.0
  %341 = vmatpush1.msra.mxu0 %v298
  %342 = vmatprep.subr.mxu0 0.0
  %343 = vmatpush1.msra.mxu0 %v297
  %344 = vmatprep.subr.mxu0 0.0
  %345 = vmatpush2.msra.mxu0 0.0
  %346 = vmatprep.subr.mxu0 0.0
  %347 = vmatpush2.msra.mxu0 0.0
  %348 = vmatprep.subr.mxu0 0.0
  %349 = vmatpush2.msra.mxu0 0.0
  %350 = vmatprep.subr.mxu0 0.0
  %351 = vmatpush2.msra.mxu0 0.0
  %352 = vmatprep.subr.mxu0 0.0
  %353 = vmatpush2.msra.mxu0 0.0
  %354 = vmatprep.subr.mxu0 0.0
  %355 = vmatpush2.msra.mxu0 0.0
  %356 = vmatprep.subr.mxu0 0.0
  %357 = vmatpush2.msra.mxu0 0.0
  %358 = vmatprep.subr.mxu0 0.0
  %359 = vmatpush2.msra.mxu0 0.0
  %360 = vmatprep.subr.mxu0 0.0
  %361 = vmatpush2.msra.mxu0 0.0
  %362 = vmatprep.subr.mxu0 0.0
  %363 = vmatpush2.msra.mxu0 0.0
  %364 = vmatprep.subr.mxu0 0.0
  %365 = vmatpush2.msra.mxu0 0.0
  %366 = vmatprep.subr.mxu0 0.0
  %367 = vmatpush2.msra.mxu0 0.0
  %368 = vmatprep.subr.mxu0 0.0
  %369 = vmatpush2.msra.mxu0 0.0
  %370 = vmatprep.subr.mxu0 0.0
  %371 = vmatpush2.msra.mxu0 0.0
  %372 = vmatprep.subr.mxu0 0.0
  %373 = vmatpush2.msra.mxu0 0.0
  %374 = vmatprep.subr.mxu0 0.0
  %375 = vmatpush2.msra.mxu0 0.0
  %376 = vmatprep.mubr.f32.mxu0 0.0
  %377 = vmatmul.mubr.f32.gmra.mxu0 %v225
  %v378 = vpop.f32.mrf.mxu0
  %v379 = vadd.f32 %v310, %v378
  %v380 = vpop.f32.mrf.mxu0
  %381 = vdwg.mxu0
  %v382 = vlaneseq
  %v383 = vand.u32 %v382, 127
  %vm384 = vcmp.eq.s32.totalorder %v383, 0
  %v385 = vtanh.pop %v294
  %v386 = vxor.u32 %v294, 2147483648
  %v387 = vmul.f32 %v386, 1.442695
  %v388 = vpow.pop %v387
  %v389 = vadd.f32 %v388, 1.0
  %v390 = vrcp.pop %v389
  %v391 = vmul.f32 1.0, %v390
  %v392 = vsel %vm384, %v385, %v391
  %vm393 = vcmask 31744
  %394 = vst.msk [vmem:[%s9] sm:$0xff] %vm393, %v392
  %v395 = vtanh.pop %v379
  %396 = vst.msk [vmem:[%s10] sm:$0xff] %vm393, %v395
  // Predicated region
  $region38: #{tpu_custom_call.1} parent=0 // pred_check
    _
  $region39: #{tpu_custom_call.1} parent=0 // pred_check_branch
    %398 = sbr.rel (0) target = $region41
  $region40: #{tpu_custom_call.1} parent=0 // pred_region
    _
  $region41: #{tpu_custom_call.1} parent=0 // pred_fallthru
    _
  // Predicated region
  $region42: #{tpu_custom_call.1} parent=0 // pred_check
    _
  $region43: #{tpu_custom_call.1} parent=0 // pred_check_branch
    %400 = sbr.rel (0) target = $region45
  $region44: #{tpu_custom_call.1} parent=0 // pred_region
    _
  $region45: #{tpu_custom_call.1} parent=0 // pred_fallthru
    _
  // Predicated region
  $region46: #{tpu_custom_call.1} parent=0 // pred_check
    _
  $region47: #{tpu_custom_call.1} parent=0 // pred_check_branch
    %402 = sbr.rel (0) target = $region49
  $region48: #{tpu_custom_call.1} parent=0 // pred_region
    _
  $region49: #{tpu_custom_call.1} parent=0 // pred_fallthru
    _
  // Predicated region
  $region50: #{tpu_custom_call.1} parent=0 // pred_check
    _
  $region51: #{tpu_custom_call.1} parent=0 // pred_check_branch
    %404 = sbr.rel (0) target = $region53
  $region52: #{tpu_custom_call.1} parent=0 // pred_region
    _
  $region53: #{tpu_custom_call.1} parent=0 // pred_fallthru
    _

</llo_original>
